<compile_context>
chip_gen: v6e
topology: v6e:2x2x1
jax: 0.10.0
libtpu: 0.0.40
codegen_flags: <defaults>
</compile_context>

<pallas_src>
import functools
import math

import jax
import jax.numpy as jnp
from jax.experimental import pallas as pl
from jax.experimental.pallas import tpu as pltpu


def _coalign_kernel(a_ref, b_ref, ma_ref, mb_ref,
                    align_a_ref, align_b_ref, w_ab_ref, w_ba_ref, *, scale):
    """Fused both-direction co-attention for one batch element.

    a_ref, b_ref : (1, L, hdim)  masked sequences (L = rv_num*rv_len), native dtype
    ma_ref/mb_ref: (1, 1, L)     masks as lane-dense rows (f32 {0,1})
    align_*_ref  : (1, L, hdim)  aligned outputs (query-mask applied in wrapper)
    w_*_ref      : (1, L, L)     attention weights
    """
    a = a_ref[0]                      # [L, hdim], native dtype (MXU operand)
    b = b_ref[0]                      # [L, hdim]
    ma = ma_ref[0]                    # [1, L] f32
    mb = mb_ref[0]                    # [1, L] f32

    # Single affinity matmul per batch; the reverse direction is its transpose.
    s_ab = jax.lax.dot_general(
        a, b, (((1,), (1,)), ((), ())),
        preferred_element_type=jnp.float32) * scale        # [L, L] f32
    s_ba = s_ab.T                                          # XLU transpose (free slot)

    def masked_softmax(s, key_mask_row):
        # f32 softmax math (v5e VPU/EUP have no bf16 path).
        s = jnp.where(key_mask_row > 0.5, s, jnp.float32(-1e9))
        s = s - jnp.max(s, axis=-1, keepdims=True)
        p = jnp.exp(s)
        denom = jnp.sum(p, axis=-1, keepdims=True)
        return p * pl.reciprocal(denom, approx=True)       # EUP reciprocal

    w_ab = masked_softmax(s_ab, mb)                        # [L, L] f32
    w_ba = masked_softmax(s_ba, ma)                        # [L, L] f32

    # align = weights @ kv  (probabilities cast to kv dtype for MXU rate).
    align_a = jnp.dot(w_ab.astype(b.dtype), b, preferred_element_type=jnp.float32)
    align_b = jnp.dot(w_ba.astype(a.dtype), a, preferred_element_type=jnp.float32)

    align_a_ref[0] = align_a.astype(align_a_ref.dtype)
    align_b_ref[0] = align_b.astype(align_b_ref.dtype)
    w_ab_ref[0] = w_ab.astype(w_ab_ref.dtype)
    w_ba_ref[0] = w_ba.astype(w_ba_ref.dtype)


def coalign_forward(seq_a, seq_b, mask_a, mask_b):
    """CoAlign.forward with SCALEDDOT interaction and IDENTITY features."""
    assert seq_a.shape == seq_b.shape and seq_a.ndim == 4
    bz, rv_num, rv_len, hdim = seq_a.shape
    L = rv_num * rv_len
    scale = 1.0 / math.sqrt(hdim)
    out_dtype = seq_a.dtype

    mask_a = mask_a.astype(jnp.float32)
    mask_b = mask_b.astype(jnp.float32)

    # masked_tensor (elementwise glue, plain JAX) + flatten the review axis.
    a = (seq_a * mask_a[..., None]).reshape(bz, L, hdim)
    b = (seq_b * mask_b[..., None]).reshape(bz, L, hdim)
    ma_row = mask_a.reshape(bz, 1, L)
    mb_row = mask_b.reshape(bz, 1, L)

    kernel = functools.partial(_coalign_kernel, scale=scale)

    align_a, align_b, w_ab, w_ba = pl.pallas_call(
        kernel,
        out_shape=(
            jax.ShapeDtypeStruct((bz, L, hdim), out_dtype),
            jax.ShapeDtypeStruct((bz, L, hdim), out_dtype),
            jax.ShapeDtypeStruct((bz, L, L), out_dtype),
            jax.ShapeDtypeStruct((bz, L, L), out_dtype),
        ),
        grid_spec=pltpu.PrefetchScalarGridSpec(
            num_scalar_prefetch=0,
            grid=(bz,),
            in_specs=[
                pl.BlockSpec((1, L, hdim), lambda i: (i, 0, 0)),
                pl.BlockSpec((1, L, hdim), lambda i: (i, 0, 0)),
                pl.BlockSpec((1, 1, L), lambda i: (i, 0, 0)),
                pl.BlockSpec((1, 1, L), lambda i: (i, 0, 0)),
            ],
            out_specs=[
                pl.BlockSpec((1, L, hdim), lambda i: (i, 0, 0)),
                pl.BlockSpec((1, L, hdim), lambda i: (i, 0, 0)),
                pl.BlockSpec((1, L, L), lambda i: (i, 0, 0)),
                pl.BlockSpec((1, L, L), lambda i: (i, 0, 0)),
            ],
        ),
        compiler_params=pltpu.CompilerParams(
            dimension_semantics=("parallel",)),
    )(a, b, ma_row, mb_row)

    # masked_tensor(align, query_mask): applied here on the lane-dense output
    # to avoid a last-dim-1 VMEM block inside the kernel.
    align_a = align_a * mask_a.reshape(bz, L, 1)
    align_b = align_b * mask_b.reshape(bz, L, 1)

    # Module-facing shapes (free reshapes of contiguous arrays).
    align_a = align_a.reshape(bz * rv_num, rv_len, hdim)
    align_b = align_b.reshape(bz * rv_num, rv_len, hdim)
    atob_weights = w_ab.reshape(bz * rv_num, rv_len, L)
    btoa_weights = w_ba.reshape(bz * rv_num, rv_len, L)
    return align_a, align_b, atob_weights, btoa_weights


def _reference_forward(seq_a, seq_b, mask_a, mask_b):
    """Pure-JAX reference (mirrors the PyTorch forward)."""
    bz, rv_num, rv_len, hdim = seq_a.shape
    L = rv_num * rv_len
    scale = 1.0 / math.sqrt(hdim)
    sa = (seq_a * mask_a[..., None]).reshape(bz, L, hdim)
    sb = (seq_b * mask_b[..., None]).reshape(bz, L, hdim)
    ma = mask_a.reshape(bz, L)
    mb = mask_b.reshape(bz, L)

    def one_dir(q_full, kv_full, mq, mk):
        q = q_full.reshape(bz, rv_num, rv_len, hdim)
        s = jnp.einsum('bnqd,bkd->bnqk', q, kv_full) * scale
        s = jnp.where(mk[:, None, None, :] > 0.5, s, -1e9)
        w = jax.nn.softmax(s, axis=-1)
        al = jnp.einsum('bnqk,bkd->bnqd', w, kv_full)
        al = al * mq.reshape(bz, rv_num, rv_len, 1)
        return (al.reshape(bz * rv_num, rv_len, hdim),
                w.reshape(bz * rv_num, rv_len, L))

    align_a, wa = one_dir(sa, sb, ma, mb)
    align_b, wb = one_dir(sb, sa, mb, ma)
    return align_a, align_b, wa, wb


if __name__ == "__main__":
    key = jax.random.PRNGKey(0)
    bz, rv_num, rv_len, hdim = 2, 4, 8, 32

    k1, k2, k3, k4 = jax.random.split(key, 4)
    seq_a = jax.random.normal(k1, (bz, rv_num, rv_len, hdim), dtype=jnp.float32)
    seq_b = jax.random.normal(k2, (bz, rv_num, rv_len, hdim), dtype=jnp.float32)
    mask_a = (jax.random.uniform(k3, (bz, rv_num, rv_len)) > 0.3).astype(jnp.float32)
    mask_b = (jax.random.uniform(k4, (bz, rv_num, rv_len)) > 0.3).astype(jnp.float32)
    # make sure every review has at least one valid token
    mask_a = mask_a.at[:, :, 0].set(1.0)
    mask_b = mask_b.at[:, :, 0].set(1.0)

    outs = coalign_forward(seq_a, seq_b, mask_a, mask_b)
    outs = jax.block_until_ready(outs)

    refs = _reference_forward(seq_a, seq_b, mask_a, mask_b)
    for o, r in zip(outs, refs):
        assert o.shape == r.shape, (o.shape, r.shape)
        # slightly loose tolerance: EUP approx-reciprocal in the softmax denom
        assert jnp.allclose(o, r, atol=2e-3, rtol=2e-3), float(jnp.max(jnp.abs(o - r)))

    print("KERNEL_OK")
</pallas_src>

<mosaic_0001>
module attributes {stable_mosaic.version = 11 : i64} {
  func.func @_coalign_kernel(%arg0: i32, %arg1: memref<1x32x32xf32, #tpu.memory_space<vmem>>, %arg2: memref<1x32x32xf32, #tpu.memory_space<vmem>>, %arg3: memref<1x1x32xf32, #tpu.memory_space<vmem>>, %arg4: memref<1x1x32xf32, #tpu.memory_space<vmem>>, %arg5: memref<1x32x32xf32, #tpu.memory_space<vmem>>, %arg6: memref<1x32x32xf32, #tpu.memory_space<vmem>>, %arg7: memref<1x32x32xf32, #tpu.memory_space<vmem>>, %arg8: memref<1x32x32xf32, #tpu.memory_space<vmem>>) attributes {dimension_semantics = [#tpu.dimension_semantics<parallel>], iteration_bounds = array<i64: 2>, scalar_prefetch = 0 : i64, scratch_operands = 0 : i64, tpu.core_type = #tpu.core_type<tc>, window_params = [{transform_indices = @transform_0, window_bounds = array<i64: 1, 32, 32>}, {transform_indices = @transform_1, window_bounds = array<i64: 1, 32, 32>}, {transform_indices = @transform_2, window_bounds = array<i64: 1, 1, 32>}, {transform_indices = @transform_3, window_bounds = array<i64: 1, 1, 32>}, {transform_indices = @transform_4, window_bounds = array<i64: 1, 32, 32>}, {transform_indices = @transform_5, window_bounds = array<i64: 1, 32, 32>}, {transform_indices = @transform_6, window_bounds = array<i64: 1, 32, 32>}, {transform_indices = @transform_7, window_bounds = array<i64: 1, 32, 32>}]} {
    %c0 = arith.constant 0 : index
    %c0_0 = arith.constant 0 : index
    %c0_1 = arith.constant 0 : index
    %0 = vector.load %arg1[%c0, %c0_0, %c0_1] : memref<1x32x32xf32, #tpu.memory_space<vmem>>, vector<1x32x32xf32>
    %1 = vector.shape_cast %0 : vector<1x32x32xf32> to vector<32x32xf32>
    %c0_2 = arith.constant 0 : index
    %c0_3 = arith.constant 0 : index
    %c0_4 = arith.constant 0 : index
    %2 = vector.load %arg2[%c0_2, %c0_3, %c0_4] : memref<1x32x32xf32, #tpu.memory_space<vmem>>, vector<1x32x32xf32>
    %3 = vector.shape_cast %2 : vector<1x32x32xf32> to vector<32x32xf32>
    %c0_5 = arith.constant 0 : index
    %c0_6 = arith.constant 0 : index
    %c0_7 = arith.constant 0 : index
    %4 = vector.load %arg3[%c0_5, %c0_6, %c0_7] : memref<1x1x32xf32, #tpu.memory_space<vmem>>, vector<1x1x32xf32>
    %5 = vector.shape_cast %4 : vector<1x1x32xf32> to vector<1x32xf32>
    %c0_8 = arith.constant 0 : index
    %c0_9 = arith.constant 0 : index
    %c0_10 = arith.constant 0 : index
    %6 = vector.load %arg4[%c0_8, %c0_9, %c0_10] : memref<1x1x32xf32, #tpu.memory_space<vmem>>, vector<1x1x32xf32>
    %7 = vector.shape_cast %6 : vector<1x1x32xf32> to vector<1x32xf32>
    %cst = arith.constant dense<0.000000e+00> : vector<32x32xf32>
    %8 = tpu.matmul %1, %3, %cst {dimension_numbers = #tpu.dot_dimension_numbers<[1], [1], [0], [0], [0, 0, 1, 0], [], []>} : vector<32x32xf32>, vector<32x32xf32>, vector<32x32xf32> -> vector<32x32xf32>
    %cst_11 = arith.constant 0.176776692 : f32
    %9 = vector.broadcast %cst_11 : f32 to vector<32x32xf32>
    %10 = arith.mulf %8, %9 : vector<32x32xf32>
    %11 = tpu.transpose %10, [1, 0] : vector<32x32xf32> -> vector<32x32xf32>
    %cst_12 = arith.constant 5.000000e-01 : f32
    %12 = vector.broadcast %cst_12 : f32 to vector<1x32xf32>
    %13 = arith.cmpf ogt, %7, %12 : vector<1x32xf32>
    %cst_13 = arith.constant -1.000000e+09 : f32
    %14 = vector.shape_cast %13 : vector<1x32xi1> to vector<1x32xi1>
    %15 = vector.broadcast %14 : vector<1x32xi1> to vector<32x32xi1>
    %16 = vector.broadcast %cst_13 : f32 to vector<32x32xf32>
    %17 = arith.select %15, %10, %16 : vector<32x32xi1>, vector<32x32xf32>
    %cst_14 = arith.constant dense<0xFF800000> : vector<32xf32>
    %18 = vector.multi_reduction <maximumf>, %17, %cst_14 [1] : vector<32x32xf32> to vector<32xf32>
    %19 = vector.shape_cast %18 : vector<32xf32> to vector<32x1xf32>
    %20 = vector.broadcast %19 : vector<32x1xf32> to vector<32x32xf32>
    %21 = arith.subf %17, %20 : vector<32x32xf32>
    %22 = math.exp %21 : vector<32x32xf32>
    %cst_15 = arith.constant dense<0.000000e+00> : vector<32xf32>
    %23 = vector.multi_reduction <add>, %22, %cst_15 [1] : vector<32x32xf32> to vector<32xf32>
    %24 = vector.shape_cast %23 : vector<32xf32> to vector<32x1xf32>
    %25 = tpu.reciprocal %24 {approx = true} : vector<32x1xf32> -> vector<32x1xf32>
    %26 = vector.broadcast %25 : vector<32x1xf32> to vector<32x32xf32>
    %27 = arith.mulf %22, %26 : vector<32x32xf32>
    %cst_16 = arith.constant 5.000000e-01 : f32
    %28 = vector.broadcast %cst_16 : f32 to vector<1x32xf32>
    %29 = arith.cmpf ogt, %5, %28 : vector<1x32xf32>
    %cst_17 = arith.constant -1.000000e+09 : f32
    %30 = vector.shape_cast %29 : vector<1x32xi1> to vector<1x32xi1>
    %31 = vector.broadcast %30 : vector<1x32xi1> to vector<32x32xi1>
    %32 = vector.broadcast %cst_17 : f32 to vector<32x32xf32>
    %33 = arith.select %31, %11, %32 : vector<32x32xi1>, vector<32x32xf32>
    %cst_18 = arith.constant dense<0xFF800000> : vector<32xf32>
    %34 = vector.multi_reduction <maximumf>, %33, %cst_18 [1] : vector<32x32xf32> to vector<32xf32>
    %35 = vector.shape_cast %34 : vector<32xf32> to vector<32x1xf32>
    %36 = vector.broadcast %35 : vector<32x1xf32> to vector<32x32xf32>
    %37 = arith.subf %33, %36 : vector<32x32xf32>
    %38 = math.exp %37 : vector<32x32xf32>
    %cst_19 = arith.constant dense<0.000000e+00> : vector<32xf32>
    %39 = vector.multi_reduction <add>, %38, %cst_19 [1] : vector<32x32xf32> to vector<32xf32>
    %40 = vector.shape_cast %39 : vector<32xf32> to vector<32x1xf32>
    %41 = tpu.reciprocal %40 {approx = true} : vector<32x1xf32> -> vector<32x1xf32>
    %42 = vector.broadcast %41 : vector<32x1xf32> to vector<32x32xf32>
    %43 = arith.mulf %38, %42 : vector<32x32xf32>
    %cst_20 = arith.constant dense<0.000000e+00> : vector<32x32xf32>
    %44 = tpu.matmul %27, %3, %cst_20 {dimension_numbers = #tpu.dot_dimension_numbers<[1], [0], [0], [1], [0, 0, 1, 1], [], []>} : vector<32x32xf32>, vector<32x32xf32>, vector<32x32xf32> -> vector<32x32xf32>
    %cst_21 = arith.constant dense<0.000000e+00> : vector<32x32xf32>
    %45 = tpu.matmul %43, %1, %cst_21 {dimension_numbers = #tpu.dot_dimension_numbers<[1], [0], [0], [1], [0, 0, 1, 1], [], []>} : vector<32x32xf32>, vector<32x32xf32>, vector<32x32xf32> -> vector<32x32xf32>
    %c0_22 = arith.constant 0 : index
    %c0_23 = arith.constant 0 : index
    %c0_24 = arith.constant 0 : index
    %46 = vector.load %arg5[%c0_22, %c0_23, %c0_24] : memref<1x32x32xf32, #tpu.memory_space<vmem>>, vector<1x32x32xf32>
    %47 = vector.shape_cast %46 : vector<1x32x32xf32> to vector<32x32xf32>
    %48 = vector.shape_cast %44 : vector<32x32xf32> to vector<1x32x32xf32>
    tpu.vector_store %arg5[%c0_22, %c0_23, %c0_24], %48 {strides = array<i32>} : memref<1x32x32xf32, #tpu.memory_space<vmem>>, vector<1x32x32xf32>,
    %c0_25 = arith.constant 0 : index
    %c0_26 = arith.constant 0 : index
    %c0_27 = arith.constant 0 : index
    %49 = vector.load %arg6[%c0_25, %c0_26, %c0_27] : memref<1x32x32xf32, #tpu.memory_space<vmem>>, vector<1x32x32xf32>
    %50 = vector.shape_cast %49 : vector<1x32x32xf32> to vector<32x32xf32>
    %51 = vector.shape_cast %45 : vector<32x32xf32> to vector<1x32x32xf32>
    tpu.vector_store %arg6[%c0_25, %c0_26, %c0_27], %51 {strides = array<i32>} : memref<1x32x32xf32, #tpu.memory_space<vmem>>, vector<1x32x32xf32>,
    %c0_28 = arith.constant 0 : index
    %c0_29 = arith.constant 0 : index
    %c0_30 = arith.constant 0 : index
    %52 = vector.load %arg7[%c0_28, %c0_29, %c0_30] : memref<1x32x32xf32, #tpu.memory_space<vmem>>, vector<1x32x32xf32>
    %53 = vector.shape_cast %52 : vector<1x32x32xf32> to vector<32x32xf32>
    %54 = vector.shape_cast %27 : vector<32x32xf32> to vector<1x32x32xf32>
    tpu.vector_store %arg7[%c0_28, %c0_29, %c0_30], %54 {strides = array<i32>} : memref<1x32x32xf32, #tpu.memory_space<vmem>>, vector<1x32x32xf32>,
    %c0_31 = arith.constant 0 : index
    %c0_32 = arith.constant 0 : index
    %c0_33 = arith.constant 0 : index
    %55 = vector.load %arg8[%c0_31, %c0_32, %c0_33] : memref<1x32x32xf32, #tpu.memory_space<vmem>>, vector<1x32x32xf32>
    %56 = vector.shape_cast %55 : vector<1x32x32xf32> to vector<32x32xf32>
    %57 = vector.shape_cast %43 : vector<32x32xf32> to vector<1x32x32xf32>
    tpu.vector_store %arg8[%c0_31, %c0_32, %c0_33], %57 {strides = array<i32>} : memref<1x32x32xf32, #tpu.memory_space<vmem>>, vector<1x32x32xf32>,
    return
  }
  func.func @transform_0(%arg0: i32) -> (i32, i32, i32) {
    %c0_i32 = arith.constant 0 : i32
    %c0_i32_0 = arith.constant 0 : i32
    %c0_i32_1 = arith.constant 0 : i32
    return %arg0, %c0_i32, %c0_i32_0 : i32, i32, i32
  }
  func.func @transform_1(%arg0: i32) -> (i32, i32, i32) {
    %c0_i32 = arith.constant 0 : i32
    %c0_i32_0 = arith.constant 0 : i32
    %c0_i32_1 = arith.constant 0 : i32
    return %arg0, %c0_i32, %c0_i32_0 : i32, i32, i32
  }
  func.func @transform_2(%arg0: i32) -> (i32, i32, i32) {
    %c0_i32 = arith.constant 0 : i32
    %c0_i32_0 = arith.constant 0 : i32
    %c0_i32_1 = arith.constant 0 : i32
    return %arg0, %c0_i32, %c0_i32_0 : i32, i32, i32
  }
  func.func @transform_3(%arg0: i32) -> (i32, i32, i32) {
    %c0_i32 = arith.constant 0 : i32
    %c0_i32_0 = arith.constant 0 : i32
    %c0_i32_1 = arith.constant 0 : i32
    return %arg0, %c0_i32, %c0_i32_0 : i32, i32, i32
  }
  func.func @transform_4(%arg0: i32) -> (i32, i32, i32) {
    %c0_i32 = arith.constant 0 : i32
    %c0_i32_0 = arith.constant 0 : i32
    %c0_i32_1 = arith.constant 0 : i32
    return %arg0, %c0_i32, %c0_i32_0 : i32, i32, i32
  }
  func.func @transform_5(%arg0: i32) -> (i32, i32, i32) {
    %c0_i32 = arith.constant 0 : i32
    %c0_i32_0 = arith.constant 0 : i32
    %c0_i32_1 = arith.constant 0 : i32
    return %arg0, %c0_i32, %c0_i32_0 : i32, i32, i32
  }
  func.func @transform_6(%arg0: i32) -> (i32, i32, i32) {
    %c0_i32 = arith.constant 0 : i32
    %c0_i32_0 = arith.constant 0 : i32
    %c0_i32_1 = arith.constant 0 : i32
    return %arg0, %c0_i32, %c0_i32_0 : i32, i32, i32
  }
  func.func @transform_7(%arg0: i32) -> (i32, i32, i32) {
    %c0_i32 = arith.constant 0 : i32
    %c0_i32_0 = arith.constant 0 : i32
    %c0_i32_1 = arith.constant 0 : i32
    return %arg0, %c0_i32, %c0_i32_0 : i32, i32, i32
  }
}

</mosaic_0001>

<llo_original>
// kernel: tpu_custom_call.1
$region0: #{tpu_custom_call.1}
  #allocation0 [shape = 'u32[]', space=smem, size = 0x4, offset = 0x4, fixed_abs, tag = 'smem constant byte address 0x4 - core index']
  #allocation1 [shape = 'u32[144,128]{1,0:T(1,128)}', space=vmem, size = 0x12000, scoped, tag = 'internal scratch']
  %s0 = inlined_call_operand.hbm [shape: f32[2,32,32], index: 0, kind: input, shape index: {}]
  %s1 = inlined_call_operand.hbm [shape: f32[2,32,32], index: 1, kind: input, shape index: {}]
  %s2 = inlined_call_operand.vmem [shape: f32[2,1,32], index: 2, kind: input, shape index: {}]
  %s3 = inlined_call_operand.vmem [shape: f32[2,1,32], index: 3, kind: input, shape index: {}]
  %s4 = inlined_call_operand.hbm [shape: f32[2,32,32], index: 4, kind: output, shape index: {0}]
  %s5 = inlined_call_operand.hbm [shape: f32[2,32,32], index: 5, kind: output, shape index: {1}]
  %s6 = inlined_call_operand.hbm [shape: f32[2,32,32], index: 6, kind: output, shape index: {2}]
  %s7 = inlined_call_operand.hbm [shape: f32[2,32,32], index: 7, kind: output, shape index: {3}]
  %8 = xla_tuple %s4, %s5, %s6, %s7
  %s9 = sld [smem:[#allocation0]]
  $region81: #{tpu_custom_call.1} parent=0
    _
  %s11 = ssub.s32 1, %s9
  %s12 = scalar_select 0, %s11, %s9
  $region1: #{tpu_custom_call.1} parent=0
    #allocation2 [shape = 'u8[32768]{0}', space=vmem, size = 0x8000, scoped, tag = 'input window, operand 0']
    #allocation3 [shape = 's32[2]{0}', space=sflag, size = 0x8, scoped, tag = 'scoped memory for tpu_custom_call.1']
    #allocation4 [shape = 's32[2]{0}', space=sflag, size = 0x8, scoped, tag = 'scoped memory for tpu_custom_call.1']
    #allocation5 [shape = 'u8[32768]{0}', space=vmem, size = 0x8000, scoped, tag = 'input window, operand 1']
    #allocation6 [shape = 's32[2]{0}', space=sflag, size = 0x8, scoped, tag = 'scoped memory for tpu_custom_call.1']
    #allocation7 [shape = 'u8[32768]{0}', space=vmem, size = 0x8000, scoped, tag = 'output window, operand 0']
    #allocation8 [shape = 'u8[32768]{0}', space=vmem, size = 0x8000, scoped, tag = 'output window, operand 1']
    #allocation9 [shape = 's32[2]{0}', space=sflag, size = 0x8, scoped, tag = 'scoped memory for tpu_custom_call.1']
    #allocation10 [shape = 'u8[32768]{0}', space=vmem, size = 0x8000, scoped, tag = 'output window, operand 2']
    #allocation11 [shape = 'u8[32768]{0}', space=vmem, size = 0x8000, scoped, tag = 'output window, operand 3']
    #allocation12 [shape = 's32[2]{0}', space=sflag, size = 0x8, scoped, tag = 'scoped memory for tpu_custom_call.1']
    %13 = vsyncpa [#allocation3], 0
    %s14 = scalar_lea.sflag [#allocation3], 1
    %15 = vsyncpa %s14, 0
    %16 = vsyncpa [#allocation6], 0
    %s17 = scalar_lea.sflag [#allocation6], 1
    %18 = vsyncpa %s17, 0
    %19 = vsyncpa [#allocation4], 0
    %s20 = scalar_lea.sflag [#allocation4], 1
    %21 = vsyncpa %s20, 0
    %22 = vsyncpa [#allocation9], 0
    %s23 = scalar_lea.sflag [#allocation9], 1
    %24 = vsyncpa %s23, 0
    %25 = vsyncpa [#allocation12], 0
    %s26 = scalar_lea.sflag [#allocation12], 1
    %27 = vsyncpa %s26, 0
    loop: start=0, step=1, limit=4
    $region2: #{tpu_custom_call.1} parent=1 // loop_pre_header
      _
    $region3: #{tpu_custom_call.1} parent=1 // loop_header
      %s29 = sphi 0, %s33
      %p30 = scmp.ge.s32.totalorder %s29, 4
      %s39 = sphi 0, %s41
      %s42 = sphi 0, %s39
      %s43 = sphi 0, %s42
      %s59 = sphi 0, %s43
      %s65 = sphi 0, %s67
      %s68 = sphi 0, %s65
      %s69 = sphi 0, %s68
      %s85 = sphi 0, %s69
      %s91 = sphi 0, %s93
      %s94 = sphi 0, %s91
      %s95 = sphi 0, %s94
      %s111 = sphi 0, %s95
      %s117 = sphi 0, %s119
      %s120 = sphi 0, %s117
      %s121 = sphi 0, %s120
      %s137 = sphi 0, %s121
      %s143 = sphi 0, %s145
      %s146 = sphi 0, %s143
      %s147 = sphi 0, %s146
      %s163 = sphi 0, %s147
      %s169 = sphi 0, %s171
      %s172 = sphi 0, %s169
      %s173 = sphi 0, %s172
      %s189 = sphi 0, %s173
      %s195 = sphi 0, %s197
      %s198 = sphi 0, %s195
      %s199 = sphi 0, %s198
      %s215 = sphi 0, %s199
      %s221 = sphi 0, %s223
      %s224 = sphi 0, %s221
      %s225 = sphi 0, %s224
      %s241 = sphi 0, %s225
    $region4: #{tpu_custom_call.1} parent=1 // loop_header_branch
      %32 = sbr.rel (%p30) target = $region8
    $region5: #{tpu_custom_call.1} parent=1 // loop_body
      %s34 = ssub.s32 %s29, 1
      %s35 = ssub.s32 %s29, 2
      %s36 = sadd.s32 %s29, 1
      %s37 = ssub.s32 %s29, %s36
      %p38 = scmp.eq.s32.totalorder %s37, 0
      %s40 = sadd.s32 %s39, 1
      %s41 = scalar_select %p38, %s39, %s40
      %p44 = pneg %p38
      %p45 = scmp.eq.s32.totalorder %s29, 1
      %p46 = por %p44, %p45
      %p47 = scmp.ne.s32.totalorder %s39, %s42
      %p48 = scmp.eq.s32.totalorder %s29, 0
      %p49 = por %p47, %p48
      %p50 = scmp.ne.s32.totalorder %s39, %s42
      %p51 = scmp.eq.s32.totalorder %s34, 1
      %p52 = por %p50, %p51
      %p53 = scmp.ne.s32.totalorder %s42, %s43
      %p54 = scmp.eq.s32.totalorder %s34, 0
      %p55 = por %p53, %p54
      %p56 = scmp.ne.s32.totalorder %s42, %s43
      %p57 = scmp.eq.s32.totalorder %s35, 1
      %p58 = por %p56, %p57
      %p60 = scmp.ne.s32.totalorder %s43, %s59
      %p61 = scmp.eq.s32.totalorder %s35, 0
      %p62 = por %p60, %p61
      %s63 = ssub.s32 %s29, %s36
      %p64 = scmp.eq.s32.totalorder %s63, 0
      %s66 = sadd.s32 %s65, 1
      %s67 = scalar_select %p64, %s65, %s66
      %p70 = pneg %p64
      %p71 = scmp.eq.s32.totalorder %s29, 1
      %p72 = por %p70, %p71
      %p73 = scmp.ne.s32.totalorder %s65, %s68
      %p74 = scmp.eq.s32.totalorder %s29, 0
      %p75 = por %p73, %p74
      %p76 = scmp.ne.s32.totalorder %s65, %s68
      %p77 = scmp.eq.s32.totalorder %s34, 1
      %p78 = por %p76, %p77
      %p79 = scmp.ne.s32.totalorder %s68, %s69
      %p80 = scmp.eq.s32.totalorder %s34, 0
      %p81 = por %p79, %p80
      %p82 = scmp.ne.s32.totalorder %s68, %s69
      %p83 = scmp.eq.s32.totalorder %s35, 1
      %p84 = por %p82, %p83
      %p86 = scmp.ne.s32.totalorder %s69, %s85
      %p87 = scmp.eq.s32.totalorder %s35, 0
      %p88 = por %p86, %p87
      %s89 = ssub.s32 %s29, %s36
      %p90 = scmp.eq.s32.totalorder %s89, 0
      %s92 = sadd.s32 %s91, 1
      %s93 = scalar_select %p90, %s91, %s92
      %p96 = pneg %p90
      %p97 = scmp.eq.s32.totalorder %s29, 1
      %p98 = por %p96, %p97
      %p99 = scmp.ne.s32.totalorder %s91, %s94
      %p100 = scmp.eq.s32.totalorder %s29, 0
      %p101 = por %p99, %p100
      %p102 = scmp.ne.s32.totalorder %s91, %s94
      %p103 = scmp.eq.s32.totalorder %s34, 1
      %p104 = por %p102, %p103
      %p105 = scmp.ne.s32.totalorder %s94, %s95
      %p106 = scmp.eq.s32.totalorder %s34, 0
      %p107 = por %p105, %p106
      %p108 = scmp.ne.s32.totalorder %s94, %s95
      %p109 = scmp.eq.s32.totalorder %s35, 1
      %p110 = por %p108, %p109
      %p112 = scmp.ne.s32.totalorder %s95, %s111
      %p113 = scmp.eq.s32.totalorder %s35, 0
      %p114 = por %p112, %p113
      %s115 = ssub.s32 %s29, %s36
      %p116 = scmp.eq.s32.totalorder %s115, 0
      %s118 = sadd.s32 %s117, 1
      %s119 = scalar_select %p116, %s117, %s118
      %p122 = pneg %p116
      %p123 = scmp.eq.s32.totalorder %s29, 1
      %p124 = por %p122, %p123
      %p125 = scmp.ne.s32.totalorder %s117, %s120
      %p126 = scmp.eq.s32.totalorder %s29, 0
      %p127 = por %p125, %p126
      %p128 = scmp.ne.s32.totalorder %s117, %s120
      %p129 = scmp.eq.s32.totalorder %s34, 1
      %p130 = por %p128, %p129
      %p131 = scmp.ne.s32.totalorder %s120, %s121
      %p132 = scmp.eq.s32.totalorder %s34, 0
      %p133 = por %p131, %p132
      %p134 = scmp.ne.s32.totalorder %s120, %s121
      %p135 = scmp.eq.s32.totalorder %s35, 1
      %p136 = por %p134, %p135
      %p138 = scmp.ne.s32.totalorder %s121, %s137
      %p139 = scmp.eq.s32.totalorder %s35, 0
      %p140 = por %p138, %p139
      %s141 = ssub.s32 %s29, %s36
      %p142 = scmp.eq.s32.totalorder %s141, 0
      %s144 = sadd.s32 %s143, 1
      %s145 = scalar_select %p142, %s143, %s144
      %p148 = pneg %p142
      %p149 = scmp.eq.s32.totalorder %s29, 1
      %p150 = por %p148, %p149
      %p151 = scmp.ne.s32.totalorder %s143, %s146
      %p152 = scmp.eq.s32.totalorder %s29, 0
      %p153 = por %p151, %p152
      %p154 = scmp.ne.s32.totalorder %s143, %s146
      %p155 = scmp.eq.s32.totalorder %s34, 1
      %p156 = por %p154, %p155
      %p157 = scmp.ne.s32.totalorder %s146, %s147
      %p158 = scmp.eq.s32.totalorder %s34, 0
      %p159 = por %p157, %p158
      %p160 = scmp.ne.s32.totalorder %s146, %s147
      %p161 = scmp.eq.s32.totalorder %s35, 1
      %p162 = por %p160, %p161
      %p164 = scmp.ne.s32.totalorder %s147, %s163
      %p165 = scmp.eq.s32.totalorder %s35, 0
      %p166 = por %p164, %p165
      %s167 = ssub.s32 %s29, %s36
      %p168 = scmp.eq.s32.totalorder %s167, 0
      %s170 = sadd.s32 %s169, 1
      %s171 = scalar_select %p168, %s169, %s170
      %p174 = pneg %p168
      %p175 = scmp.eq.s32.totalorder %s29, 1
      %p176 = por %p174, %p175
      %p177 = scmp.ne.s32.totalorder %s169, %s172
      %p178 = scmp.eq.s32.totalorder %s29, 0
      %p179 = por %p177, %p178
      %p180 = scmp.ne.s32.totalorder %s169, %s172
      %p181 = scmp.eq.s32.totalorder %s34, 1
      %p182 = por %p180, %p181
      %p183 = scmp.ne.s32.totalorder %s172, %s173
      %p184 = scmp.eq.s32.totalorder %s34, 0
      %p185 = por %p183, %p184
      %p186 = scmp.ne.s32.totalorder %s172, %s173
      %p187 = scmp.eq.s32.totalorder %s35, 1
      %p188 = por %p186, %p187
      %p190 = scmp.ne.s32.totalorder %s173, %s189
      %p191 = scmp.eq.s32.totalorder %s35, 0
      %p192 = por %p190, %p191
      %s193 = ssub.s32 %s29, %s36
      %p194 = scmp.eq.s32.totalorder %s193, 0
      %s196 = sadd.s32 %s195, 1
      %s197 = scalar_select %p194, %s195, %s196
      %p200 = pneg %p194
      %p201 = scmp.eq.s32.totalorder %s29, 1
      %p202 = por %p200, %p201
      %p203 = scmp.ne.s32.totalorder %s195, %s198
      %p204 = scmp.eq.s32.totalorder %s29, 0
      %p205 = por %p203, %p204
      %p206 = scmp.ne.s32.totalorder %s195, %s198
      %p207 = scmp.eq.s32.totalorder %s34, 1
      %p208 = por %p206, %p207
      %p209 = scmp.ne.s32.totalorder %s198, %s199
      %p210 = scmp.eq.s32.totalorder %s34, 0
      %p211 = por %p209, %p210
      %p212 = scmp.ne.s32.totalorder %s198, %s199
      %p213 = scmp.eq.s32.totalorder %s35, 1
      %p214 = por %p212, %p213
      %p216 = scmp.ne.s32.totalorder %s199, %s215
      %p217 = scmp.eq.s32.totalorder %s35, 0
      %p218 = por %p216, %p217
      %s219 = ssub.s32 %s29, %s36
      %p220 = scmp.eq.s32.totalorder %s219, 0
      %s222 = sadd.s32 %s221, 1
      %s223 = scalar_select %p220, %s221, %s222
      %p226 = pneg %p220
      %p227 = scmp.eq.s32.totalorder %s29, 1
      %p228 = por %p226, %p227
      %p229 = scmp.ne.s32.totalorder %s221, %s224
      %p230 = scmp.eq.s32.totalorder %s29, 0
      %p231 = por %p229, %p230
      %p232 = scmp.ne.s32.totalorder %s221, %s224
      %p233 = scmp.eq.s32.totalorder %s34, 1
      %p234 = por %p232, %p233
      %p235 = scmp.ne.s32.totalorder %s224, %s225
      %p236 = scmp.eq.s32.totalorder %s34, 0
      %p237 = por %p235, %p236
      %p238 = scmp.ne.s32.totalorder %s224, %s225
      %p239 = scmp.eq.s32.totalorder %s35, 1
      %p240 = por %p238, %p239
      %p242 = scmp.ne.s32.totalorder %s225, %s241
      %p243 = scmp.eq.s32.totalorder %s35, 0
      %p244 = por %p242, %p243
      %p245 = scmp.le.s32.totalorder 1, %s29
      %p246 = scmp.lt.s32.totalorder %s29, 3
      %p247 = pnand %p245, %p246
      %p248 = pneg %p247
      // Predicated region
      $region9: #{tpu_custom_call.1} parent=5 // pred_check
        _
      $region10: #{tpu_custom_call.1} parent=5 // pred_check_branch
        %250 = sbr.rel (%p247) target = $region12
      $region11: #{tpu_custom_call.1} parent=5 // pred_region
        %s251 = ssub.s32 %s29, 1
      $region12: #{tpu_custom_call.1} parent=5 // pred_fallthru
        _
      %p252 = scmp.lt.s32.totalorder %s29, 2
      // Predicated region
      $region13: #{tpu_custom_call.1} parent=5 // pred_check
        %p253 = pneg %p252
      $region14: #{tpu_custom_call.1} parent=5 // pred_check_branch
        %255 = sbr.rel (%p253) target = $region16
      $region15: #{tpu_custom_call.1} parent=5 // pred_region
        // Predicated region
        $region17: #{tpu_custom_call.1} parent=15 // pred_check
          %p256 = pneg %p49
        $region18: #{tpu_custom_call.1} parent=15 // pred_check_branch
          %258 = sbr.rel (%p256) target = $region20
        $region19: #{tpu_custom_call.1} parent=15 // pred_region
          %s259 = sand.u32 %s39, 1
          %s260 = scalar_lea.sflag [#allocation3], %s259
          %s261 = sand.u32 %s39, 1
          %s262 = smul.addr %s261, 32
          %s263 = scalar_lea.vmem [#allocation2], %s262
          %s265 = ssub.s32 512, 512
          %266 = vsyncadd %s260, %s265
          %s267 = smul.addr %s29, 4
          %s268 = smul.addr %s267, 128
          %s269 = scalar_lea.hbm %s0, %s268
          %s270 = sshll.u32 %s263, 4
          %s271 = int_to_ptr.vmem [resolvable:$true] %s270
          %276 = dma.hbm_to_vmem [thread:$0]  %s269, 512, %s271, %s260, 128, 128, 8
        $region20: #{tpu_custom_call.1} parent=15 // pred_fallthru
          _
        // Predicated region
        $region21: #{tpu_custom_call.1} parent=15 // pred_check
          %p277 = pneg %p75
        $region22: #{tpu_custom_call.1} parent=15 // pred_check_branch
          %279 = sbr.rel (%p277) target = $region24
        $region23: #{tpu_custom_call.1} parent=15 // pred_region
          %s280 = sand.u32 %s65, 1
          %s281 = scalar_lea.sflag [#allocation6], %s280
          %s282 = sand.u32 %s65, 1
          %s283 = smul.addr %s282, 32
          %s284 = scalar_lea.vmem [#allocation5], %s283
          %s286 = ssub.s32 512, 512
          %287 = vsyncadd %s281, %s286
          %s288 = smul.addr %s29, 4
          %s289 = smul.addr %s288, 128
          %s290 = scalar_lea.hbm %s1, %s289
          %s291 = sshll.u32 %s284, 4
          %s292 = int_to_ptr.vmem [resolvable:$true] %s291
          %297 = dma.hbm_to_vmem [thread:$0]  %s290, 512, %s292, %s281, 128, 128, 8
        $region24: #{tpu_custom_call.1} parent=15 // pred_fallthru
          _
        // Predicated region
        $region25: #{tpu_custom_call.1} parent=15 // pred_check
          %p298 = pneg %p101
        $region26: #{tpu_custom_call.1} parent=15 // pred_check_branch
          %300 = sbr.rel (%p298) target = $region28
        $region27: #{tpu_custom_call.1} parent=15 // pred_region
          %p301 = scmp.lt.s32.totalorder %s29, 1
          %s302 = scalar_select %p301, %s29, 1
          %s303 = scalar_lea.vmem %s2, %s302
        $region28: #{tpu_custom_call.1} parent=15 // pred_fallthru
          _
        // Predicated region
        $region29: #{tpu_custom_call.1} parent=15 // pred_check
          %p304 = pneg %p127
        $region30: #{tpu_custom_call.1} parent=15 // pred_check_branch
          %306 = sbr.rel (%p304) target = $region32
        $region31: #{tpu_custom_call.1} parent=15 // pred_region
          %p307 = scmp.lt.s32.totalorder %s29, 1
          %s308 = scalar_select %p307, %s29, 1
          %s309 = scalar_lea.vmem %s3, %s308
        $region32: #{tpu_custom_call.1} parent=15 // pred_fallthru
          _
      $region16: #{tpu_custom_call.1} parent=5 // pred_fallthru
        _
      %p310 = scmp.le.s32.totalorder 1, %s29
      %p311 = scmp.lt.s32.totalorder %s29, 3
      %p312 = pnand %p310, %p311
      %p313 = pneg %p312
      // Predicated region
      $region33: #{tpu_custom_call.1} parent=5 // pred_check
        _
      $region34: #{tpu_custom_call.1} parent=5 // pred_check_branch
        %315 = sbr.rel (%p312) target = $region36
      $region35: #{tpu_custom_call.1} parent=5 // pred_region
        %s316 = ssub.s32 %s29, 1
        %s317 = sand.u32 %s42, 1
        %s318 = scalar_lea.sflag [#allocation3], %s317
        %s319 = sand.u32 %s42, 1
        %s320 = smul.addr %s319, 32
        %s321 = scalar_lea.vmem [#allocation2], %s320
        // Predicated region
        $region37: #{tpu_custom_call.1} parent=35 // pred_check
          %p322 = pneg %p55
        $region38: #{tpu_custom_call.1} parent=35 // pred_check_branch
          %324 = sbr.rel (%p322) target = $region40
        $region39: #{tpu_custom_call.1} parent=35 // pred_region
          %325 = dma.done %s318, 512
        $region40: #{tpu_custom_call.1} parent=35 // pred_fallthru
          _
        %s326 = sand.u32 %s68, 1
        %s327 = scalar_lea.sflag [#allocation6], %s326
        %s328 = sand.u32 %s68, 1
        %s329 = smul.addr %s328, 32
        %s330 = scalar_lea.vmem [#allocation5], %s329
        // Predicated region
        $region41: #{tpu_custom_call.1} parent=35 // pred_check
          %p331 = pneg %p81
        $region42: #{tpu_custom_call.1} parent=35 // pred_check_branch
          %333 = sbr.rel (%p331) target = $region44
        $region43: #{tpu_custom_call.1} parent=35 // pred_region
          %334 = dma.done %s327, 512
        $region44: #{tpu_custom_call.1} parent=35 // pred_fallthru
          _
        %s335 = sand.u32 %s42, 1
        %s336 = scalar_lea.sflag [#allocation3], %s335
        %s337 = sand.u32 %s42, 1
        %s338 = smul.addr %s337, 32
        %s339 = scalar_lea.vmem [#allocation2], %s338
        %p340 = pneg %p55
        %p341 = pneg %p52
        %s342 = sand.u32 %s68, 1
        %s343 = scalar_lea.sflag [#allocation6], %s342
        %s344 = sand.u32 %s68, 1
        %s345 = smul.addr %s344, 32
        %s346 = scalar_lea.vmem [#allocation5], %s345
        %p347 = pneg %p81
        %p348 = pneg %p78
        %p349 = scmp.lt.s32.totalorder %s34, 1
        %s350 = scalar_select %p349, %s34, 1
        %s351 = scalar_lea.vmem %s2, %s350
        %p352 = pneg %p107
        %p353 = pneg %p104
        %p354 = scmp.lt.s32.totalorder %s34, 1
        %s355 = scalar_select %p354, %s34, 1
        %s356 = scalar_lea.vmem %s3, %s355
        %p357 = pneg %p133
        %p358 = pneg %p130
        %p359 = pneg %p159
        %p360 = pneg %p156
        %s361 = sand.u32 %s146, 1
        %s362 = scalar_lea.sflag [#allocation4], %s361
        %s363 = sand.u32 %s146, 1
        %s364 = smul.addr %s363, 32
        %s365 = scalar_lea.vmem [#allocation7], %s364
        %p366 = pneg %p185
        %p367 = pneg %p182
        %s368 = sand.u32 %s34, 1
        %s369 = scalar_lea.sflag [#allocation9], %s368
        %s370 = sand.u32 %s172, 1
        %s371 = smul.addr %s370, 32
        %s372 = scalar_lea.vmem [#allocation8], %s371
        %p373 = pneg %p211
        %p374 = pneg %p208
        %s375 = sand.u32 %s34, 1
        %s376 = scalar_lea.sflag [#allocation9], %s375
        %s377 = sand.u32 %s198, 1
        %s378 = smul.addr %s377, 32
        %s379 = scalar_lea.vmem [#allocation10], %s378
        %p380 = pneg %p237
        %p381 = pneg %p234
        %s382 = sand.u32 %s224, 1
        %s383 = scalar_lea.sflag [#allocation12], %s382
        %s384 = sand.u32 %s224, 1
        %s385 = smul.addr %s384, 32
        %s386 = scalar_lea.vmem [#allocation11], %s385
        %p387 = scmp.lt.s32.totalorder %s34, 1
        %s388 = scalar_select %p387, %s34, 1
        %s389 = scalar_lea.vmem %s2, %s388
        %p390 = scmp.lt.s32.totalorder %s34, 1
        %s391 = scalar_select %p390, %s34, 1
        %s392 = scalar_lea.vmem %s3, %s391
        %v393 = vld [vmem:[%s321] sm:$0xff]
        %v394 = vld [vmem:[%s321 + $0x8] sm:$0xff]
        %v395 = vld [vmem:[%s321 + $0x10] sm:$0xff]
        %v396 = vld [vmem:[%s321 + $0x18] sm:$0xff]
        %v397 = vld [vmem:[%s330] sm:$0xff]
        %v398 = vld [vmem:[%s330 + $0x8] sm:$0xff]
        %v399 = vld [vmem:[%s330 + $0x10] sm:$0xff]
        %v400 = vld [vmem:[%s330 + $0x18] sm:$0xff]
        %v401 = vld [vmem:[%s389] sm:$0x1]
        %v402 = vld [vmem:[%s392] sm:$0x1]
        %vm403 = vcmask 261120
        %v405 = vsel %vm403, %v393, 0
        %v408 = vsel %vm403, %v394, 0
        %v411 = vsel %vm403, %v395, 0
        %v414 = vsel %vm403, %v396, 0
        %v417 = vsel %vm403, %v397, 0
        %v420 = vsel %vm403, %v398, 0
        %v423 = vsel %vm403, %v399, 0
        %v426 = vsel %vm403, %v400, 0
        %428 = vmatprep.subr.mxu0 0.0
        %429 = vmatpush1.xpose.msra.mxu0 0.0
        %430 = vmatprep.subr.mxu0 0.0
        %431 = vmatpush1.xpose.msra.mxu0 0.0
        %432 = vmatprep.subr.mxu0 0.0
        %433 = vmatpush1.xpose.msra.mxu0 0.0
        %434 = vmatprep.subr.mxu0 0.0
        %435 = vmatpush1.xpose.msra.mxu0 0.0
        %436 = vmatprep.subr.mxu0 0.0
        %437 = vmatpush1.xpose.msra.mxu0 0.0
        %438 = vmatprep.subr.mxu0 0.0
        %439 = vmatpush1.xpose.msra.mxu0 0.0
        %440 = vmatprep.subr.mxu0 0.0
        %441 = vmatpush1.xpose.msra.mxu0 0.0
        %442 = vmatprep.subr.mxu0 0.0
        %443 = vmatpush1.xpose.msra.mxu0 0.0
        %444 = vmatprep.subr.mxu0 0.0
        %445 = vmatpush1.xpose.msra.mxu0 0.0
        %446 = vmatprep.subr.mxu0 0.0
        %447 = vmatpush1.xpose.msra.mxu0 0.0
        %448 = vmatprep.subr.mxu0 0.0
        %449 = vmatpush1.xpose.msra.mxu0 0.0
        %450 = vmatprep.subr.mxu0 0.0
        %451 = vmatpush1.xpose.msra.mxu0 0.0
        %452 = vmatprep.subr.mxu0 0.0
        %453 = vmatpush1.xpose.msra.mxu0 %v426
        %454 = vmatprep.subr.mxu0 0.0
        %455 = vmatpush1.xpose.msra.mxu0 %v423
        %456 = vmatprep.subr.mxu0 0.0
        %457 = vmatpush1.xpose.msra.mxu0 %v420
        %458 = vmatprep.subr.mxu0 0.0
        %459 = vmatpush1.xpose.msra.mxu0 %v417
        %460 = vmatprep.subr.mxu0 0.0
        %461 = vmatpush2.xpose.msra.mxu0 0.0
        %462 = vmatprep.subr.mxu0 0.0
        %463 = vmatpush2.xpose.msra.mxu0 0.0
        %464 = vmatprep.subr.mxu0 0.0
        %465 = vmatpush2.xpose.msra.mxu0 0.0
        %466 = vmatprep.subr.mxu0 0.0
        %467 = vmatpush2.xpose.msra.mxu0 0.0
        %468 = vmatprep.subr.mxu0 0.0
        %469 = vmatpush2.xpose.msra.mxu0 0.0
        %470 = vmatprep.subr.mxu0 0.0
        %471 = vmatpush2.xpose.msra.mxu0 0.0
        %472 = vmatprep.subr.mxu0 0.0
        %473 = vmatpush2.xpose.msra.mxu0 0.0
        %474 = vmatprep.subr.mxu0 0.0
        %475 = vmatpush2.xpose.msra.mxu0 0.0
        %476 = vmatprep.subr.mxu0 0.0
        %477 = vmatpush2.xpose.msra.mxu0 0.0
        %478 = vmatprep.subr.mxu0 0.0
        %479 = vmatpush2.xpose.msra.mxu0 0.0
        %480 = vmatprep.subr.mxu0 0.0
        %481 = vmatpush2.xpose.msra.mxu0 0.0
        %482 = vmatprep.subr.mxu0 0.0
        %483 = vmatpush2.xpose.msra.mxu0 0.0
        %484 = vmatprep.subr.mxu0 0.0
        %485 = vmatpush2.xpose.msra.mxu0 0.0
        %486 = vmatprep.subr.mxu0 0.0
        %487 = vmatpush2.xpose.msra.mxu0 0.0
        %488 = vmatprep.subr.mxu0 0.0
        %489 = vmatpush2.xpose.msra.mxu0 0.0
        %490 = vmatprep.subr.mxu0 0.0
        %491 = vmatpush2.xpose.msra.mxu0 0.0
        %492 = vmatprep.mubr.f32.mxu0 0.0
        %493 = vmatmul.mubr.f32.gmra.mxu0 %v405
        %v494 = vpop.f32.mrf.mxu0
        %v495 = vadd.f32 0.0, %v494
        %v496 = vpop.f32.mrf.mxu0
        %497 = vmatprep.mubr.f32.mxu0 0.0
        %498 = vmatmul.mubr.f32.gmra.mxu0 %v408
        %v499 = vpop.f32.mrf.mxu0
        %v500 = vadd.f32 0.0, %v499
        %v501 = vpop.f32.mrf.mxu0
        %502 = vmatprep.mubr.f32.mxu0 0.0
        %503 = vmatmul.mubr.f32.gmra.mxu0 %v411
        %v504 = vpop.f32.mrf.mxu0
        %v505 = vadd.f32 0.0, %v504
        %v506 = vpop.f32.mrf.mxu0
        %507 = vmatprep.mubr.f32.mxu0 0.0
        %508 = vmatmul.mubr.f32.gmra.mxu0 %v414
        %v509 = vpop.f32.mrf.mxu0
        %v510 = vadd.f32 0.0, %v509
        %v511 = vpop.f32.mrf.mxu0
        %512 = vdwg.mxu0
        %v513 = vmul.f32 %v495, 0.17677669
        %v514 = vmul.f32 %v500, 0.17677669
        %v515 = vmul.f32 %v505, 0.17677669
        %v516 = vmul.f32 %v510, 0.17677669
        %517 = vxpose.xlu0.b32.start [1/16] %v513, 128
        %518 = vxpose.xlu0.b32.cont [2/16] %v514, 128
        %519 = vxpose.xlu0.b32.cont [3/16] %v515, 128
        %520 = vxpose.xlu0.b32.cont [4/16] %v516, 128
        %521 = vxpose.xlu0.b32.cont [5/16] 0.0, 128
        %522 = vxpose.xlu0.b32.cont [6/16] 0.0, 128
        %523 = vxpose.xlu0.b32.cont [7/16] 0.0, 128
        %524 = vxpose.xlu0.b32.cont [8/16] 0.0, 128
        %525 = vxpose.xlu0.b32.cont [9/16] 0.0, 128
        %526 = vxpose.xlu0.b32.cont [10/16] 0.0, 128
        %527 = vxpose.xlu0.b32.cont [11/16] 0.0, 128
        %528 = vxpose.xlu0.b32.cont [12/16] 0.0, 128
        %529 = vxpose.xlu0.b32.cont [13/16] 0.0, 128
        %530 = vxpose.xlu0.b32.cont [14/16] 0.0, 128
        %531 = vxpose.xlu0.b32.cont [15/16] 0.0, 128
        %532 = vxpose.xlu0.b32.end [16/16] 0.0, 128
        %v533 = vpop.trf.xlu0
        %v534 = vpop.trf.xlu0
        %v535 = vpop.trf.xlu0
        %v536 = vpop.trf.xlu0
        %v537 = vpop.trf.xlu0
        %v538 = vpop.trf.xlu0
        %v539 = vpop.trf.xlu0
        %v540 = vpop.trf.xlu0
        %v541 = vpop.trf.xlu0
        %v542 = vpop.trf.xlu0
        %v543 = vpop.trf.xlu0
        %v544 = vpop.trf.xlu0
        %v545 = vpop.trf.xlu0
        %v546 = vpop.trf.xlu0
        %v547 = vpop.trf.xlu0
        %v548 = vpop.trf.xlu0
        %vm549 = vcmp.gt.f32.partialorder %v402, 0.5
        %v550 = vsel %vm549, 1, 0
        %v551 = vlaneseq
        %v552 = vshrl.u32 %v551, 7
        %v553 = vsub.s32 0, %v552
        %v554 = vrot.slane %v550, %v553
        %vm555 = vcmp.eq.s32.totalorder %v554, 1
        %v556 = vsel %vm555, %v513, -1e+09
        %v557 = vsel %vm555, %v514, -1e+09
        %v558 = vsel %vm555, %v515, -1e+09
        %v559 = vsel %vm555, %v516, -1e+09
        %v560 = vsel %vm403, %v556, -inf
        %561 = vmax.xlane.f32.xlu0 %v560
        %v562 = vpop.xlane.xlu0 %561
        %v563 = vsel %vm403, %v557, -inf
        %564 = vmax.xlane.f32.xlu0 %v563
        %v565 = vpop.xlane.xlu0 %564
        %v566 = vsel %vm403, %v558, -inf
        %567 = vmax.xlane.f32.xlu0 %v566
        %v568 = vpop.xlane.xlu0 %567
        %v569 = vsel %vm403, %v559, -inf
        %570 = vmax.xlane.f32.xlu0 %v569
        %v571 = vpop.xlane.xlu0 %570
        %v572 = vsub.f32 %v556, %v562
        %v573 = vsub.f32 %v557, %v565
        %v574 = vsub.f32 %v558, %v568
        %v575 = vsub.f32 %v559, %v571
        %v576 = vmul.f32 %v572, 1.442695
        %v577 = vpow.pop %v576
        %v578 = vmul.f32 %v573, 1.442695
        %v579 = vpow.pop %v578
        %v580 = vmul.f32 %v574, 1.442695
        %v581 = vpow.pop %v580
        %v582 = vmul.f32 %v575, 1.442695
        %v583 = vpow.pop %v582
        %v584 = vsel %vm403, %v577, 0.0
        %585 = vadd.xlane.f32.xlu0 %v584
        %v586 = vpop.xlane.xlu0 %585
        %v587 = vsel %vm403, %v579, 0.0
        %588 = vadd.xlane.f32.xlu0 %v587
        %v589 = vpop.xlane.xlu0 %588
        %v590 = vsel %vm403, %v581, 0.0
        %591 = vadd.xlane.f32.xlu0 %v590
        %v592 = vpop.xlane.xlu0 %591
        %v593 = vsel %vm403, %v583, 0.0
        %594 = vadd.xlane.f32.xlu0 %v593
        %v595 = vpop.xlane.xlu0 %594
        %v596 = vrcp.pop %v586
        %v597 = vrcp.pop %v589
        %v598 = vrcp.pop %v592
        %v599 = vrcp.pop %v595
        %v600 = vmul.f32 %v577, %v596
        %v601 = vmul.f32 %v579, %v597
        %v602 = vmul.f32 %v581, %v598
        %v603 = vmul.f32 %v583, %v599
        %vm604 = vcmp.gt.f32.partialorder %v401, 0.5
        %v605 = vsel %vm604, 1, 0
        %v606 = vlaneseq
        %v607 = vshrl.u32 %v606, 7
        %v608 = vsub.s32 0, %v607
        %v609 = vrot.slane %v605, %v608
        %vm610 = vcmp.eq.s32.totalorder %v609, 1
        %v611 = vsel %vm610, %v533, -1e+09
        %v612 = vsel %vm610, %v534, -1e+09
        %v613 = vsel %vm610, %v535, -1e+09
        %v614 = vsel %vm610, %v536, -1e+09
        %v615 = vsel %vm403, %v611, -inf
        %616 = vmax.xlane.f32.xlu0 %v615
        %v617 = vpop.xlane.xlu0 %616
        %v618 = vsel %vm403, %v612, -inf
        %619 = vmax.xlane.f32.xlu0 %v618
        %v620 = vpop.xlane.xlu0 %619
        %v621 = vsel %vm403, %v613, -inf
        %622 = vmax.xlane.f32.xlu0 %v621
        %v623 = vpop.xlane.xlu0 %622
        %v624 = vsel %vm403, %v614, -inf
        %625 = vmax.xlane.f32.xlu0 %v624
        %v626 = vpop.xlane.xlu0 %625
        %v627 = vsub.f32 %v611, %v617
        %v628 = vsub.f32 %v612, %v620
        %v629 = vsub.f32 %v613, %v623
        %v630 = vsub.f32 %v614, %v626
        %v631 = vmul.f32 %v627, 1.442695
        %v632 = vpow.pop %v631
        %v633 = vmul.f32 %v628, 1.442695
        %v634 = vpow.pop %v633
        %v635 = vmul.f32 %v629, 1.442695
        %v636 = vpow.pop %v635
        %v637 = vmul.f32 %v630, 1.442695
        %v638 = vpow.pop %v637
        %v639 = vsel %vm403, %v632, 0.0
        %640 = vadd.xlane.f32.xlu0 %v639
        %v641 = vpop.xlane.xlu0 %640
        %v642 = vsel %vm403, %v634, 0.0
        %643 = vadd.xlane.f32.xlu0 %v642
        %v644 = vpop.xlane.xlu0 %643
        %v645 = vsel %vm403, %v636, 0.0
        %646 = vadd.xlane.f32.xlu0 %v645
        %v647 = vpop.xlane.xlu0 %646
        %v648 = vsel %vm403, %v638, 0.0
        %649 = vadd.xlane.f32.xlu0 %v648
        %v650 = vpop.xlane.xlu0 %649
        %v651 = vrcp.pop %v641
        %v652 = vrcp.pop %v644
        %v653 = vrcp.pop %v647
        %v654 = vrcp.pop %v650
        %v655 = vmul.f32 %v632, %v651
        %v656 = vmul.f32 %v634, %v652
        %v657 = vmul.f32 %v636, %v653
        %v658 = vmul.f32 %v638, %v654
        %v660 = vsel %vm403, %v600, 0
        %v663 = vsel %vm403, %v601, 0
        %v666 = vsel %vm403, %v602, 0
        %v669 = vsel %vm403, %v603, 0
        %671 = vmatprep.subr.mxu0 0.0
        %672 = vmatpush1.msra.mxu0 0.0
        %673 = vmatprep.subr.mxu0 0.0
        %674 = vmatpush1.msra.mxu0 0.0
        %675 = vmatprep.subr.mxu0 0.0
        %676 = vmatpush1.msra.mxu0 0.0
        %677 = vmatprep.subr.mxu0 0.0
        %678 = vmatpush1.msra.mxu0 0.0
        %679 = vmatprep.subr.mxu0 0.0
        %680 = vmatpush1.msra.mxu0 0.0
        %681 = vmatprep.subr.mxu0 0.0
        %682 = vmatpush1.msra.mxu0 0.0
        %683 = vmatprep.subr.mxu0 0.0
        %684 = vmatpush1.msra.mxu0 0.0
        %685 = vmatprep.subr.mxu0 0.0
        %686 = vmatpush1.msra.mxu0 0.0
        %687 = vmatprep.subr.mxu0 0.0
        %688 = vmatpush1.msra.mxu0 0.0
        %689 = vmatprep.subr.mxu0 0.0
        %690 = vmatpush1.msra.mxu0 0.0
        %691 = vmatprep.subr.mxu0 0.0
        %692 = vmatpush1.msra.mxu0 0.0
        %693 = vmatprep.subr.mxu0 0.0
        %694 = vmatpush1.msra.mxu0 0.0
        %695 = vmatprep.subr.mxu0 0.0
        %696 = vmatpush1.msra.mxu0 %v400
        %697 = vmatprep.subr.mxu0 0.0
        %698 = vmatpush1.msra.mxu0 %v399
        %699 = vmatprep.subr.mxu0 0.0
        %700 = vmatpush1.msra.mxu0 %v398
        %701 = vmatprep.subr.mxu0 0.0
        %702 = vmatpush1.msra.mxu0 %v397
        %703 = vmatprep.subr.mxu0 0.0
        %704 = vmatpush2.msra.mxu0 0.0
        %705 = vmatprep.subr.mxu0 0.0
        %706 = vmatpush2.msra.mxu0 0.0
        %707 = vmatprep.subr.mxu0 0.0
        %708 = vmatpush2.msra.mxu0 0.0
        %709 = vmatprep.subr.mxu0 0.0
        %710 = vmatpush2.msra.mxu0 0.0
        %711 = vmatprep.subr.mxu0 0.0
        %712 = vmatpush2.msra.mxu0 0.0
        %713 = vmatprep.subr.mxu0 0.0
        %714 = vmatpush2.msra.mxu0 0.0
        %715 = vmatprep.subr.mxu0 0.0
        %716 = vmatpush2.msra.mxu0 0.0
        %717 = vmatprep.subr.mxu0 0.0
        %718 = vmatpush2.msra.mxu0 0.0
        %719 = vmatprep.subr.mxu0 0.0
        %720 = vmatpush2.msra.mxu0 0.0
        %721 = vmatprep.subr.mxu0 0.0
        %722 = vmatpush2.msra.mxu0 0.0
        %723 = vmatprep.subr.mxu0 0.0
        %724 = vmatpush2.msra.mxu0 0.0
        %725 = vmatprep.subr.mxu0 0.0
        %726 = vmatpush2.msra.mxu0 0.0
        %727 = vmatprep.subr.mxu0 0.0
        %728 = vmatpush2.msra.mxu0 0.0
        %729 = vmatprep.subr.mxu0 0.0
        %730 = vmatpush2.msra.mxu0 0.0
        %731 = vmatprep.subr.mxu0 0.0
        %732 = vmatpush2.msra.mxu0 0.0
        %733 = vmatprep.subr.mxu0 0.0
        %734 = vmatpush2.msra.mxu0 0.0
        %735 = vmatprep.mubr.f32.mxu0 0.0
        %736 = vmatmul.mubr.f32.gmra.mxu0 %v660
        %v737 = vpop.f32.mrf.mxu0
        %v738 = vadd.f32 0.0, %v737
        %v739 = vpop.f32.mrf.mxu0
        %740 = vmatprep.mubr.f32.mxu0 0.0
        %741 = vmatmul.mubr.f32.gmra.mxu0 %v663
        %v742 = vpop.f32.mrf.mxu0
        %v743 = vadd.f32 0.0, %v742
        %v744 = vpop.f32.mrf.mxu0
        %745 = vmatprep.mubr.f32.mxu0 0.0
        %746 = vmatmul.mubr.f32.gmra.mxu0 %v666
        %v747 = vpop.f32.mrf.mxu0
        %v748 = vadd.f32 0.0, %v747
        %v749 = vpop.f32.mrf.mxu0
        %750 = vmatprep.mubr.f32.mxu0 0.0
        %751 = vmatmul.mubr.f32.gmra.mxu0 %v669
        %v752 = vpop.f32.mrf.mxu0
        %v753 = vadd.f32 0.0, %v752
        %v754 = vpop.f32.mrf.mxu0
        %755 = vdwg.mxu0
        %v757 = vsel %vm403, %v655, 0
        %v760 = vsel %vm403, %v656, 0
        %v763 = vsel %vm403, %v657, 0
        %v766 = vsel %vm403, %v658, 0
        %768 = vmatprep.subr.mxu0 0.0
        %769 = vmatpush1.msra.mxu0 0.0
        %770 = vmatprep.subr.mxu0 0.0
        %771 = vmatpush1.msra.mxu0 0.0
        %772 = vmatprep.subr.mxu0 0.0
        %773 = vmatpush1.msra.mxu0 0.0
        %774 = vmatprep.subr.mxu0 0.0
        %775 = vmatpush1.msra.mxu0 0.0
        %776 = vmatprep.subr.mxu0 0.0
        %777 = vmatpush1.msra.mxu0 0.0
        %778 = vmatprep.subr.mxu0 0.0
        %779 = vmatpush1.msra.mxu0 0.0
        %780 = vmatprep.subr.mxu0 0.0
        %781 = vmatpush1.msra.mxu0 0.0
        %782 = vmatprep.subr.mxu0 0.0
        %783 = vmatpush1.msra.mxu0 0.0
        %784 = vmatprep.subr.mxu0 0.0
        %785 = vmatpush1.msra.mxu0 0.0
        %786 = vmatprep.subr.mxu0 0.0
        %787 = vmatpush1.msra.mxu0 0.0
        %788 = vmatprep.subr.mxu0 0.0
        %789 = vmatpush1.msra.mxu0 0.0
        %790 = vmatprep.subr.mxu0 0.0
        %791 = vmatpush1.msra.mxu0 0.0
        %792 = vmatprep.subr.mxu0 0.0
        %793 = vmatpush1.msra.mxu0 %v396
        %794 = vmatprep.subr.mxu0 0.0
        %795 = vmatpush1.msra.mxu0 %v395
        %796 = vmatprep.subr.mxu0 0.0
        %797 = vmatpush1.msra.mxu0 %v394
        %798 = vmatprep.subr.mxu0 0.0
        %799 = vmatpush1.msra.mxu0 %v393
        %800 = vmatprep.subr.mxu0 0.0
        %801 = vmatpush2.msra.mxu0 0.0
        %802 = vmatprep.subr.mxu0 0.0
        %803 = vmatpush2.msra.mxu0 0.0
        %804 = vmatprep.subr.mxu0 0.0
        %805 = vmatpush2.msra.mxu0 0.0
        %806 = vmatprep.subr.mxu0 0.0
        %807 = vmatpush2.msra.mxu0 0.0
        %808 = vmatprep.subr.mxu0 0.0
        %809 = vmatpush2.msra.mxu0 0.0
        %810 = vmatprep.subr.mxu0 0.0
        %811 = vmatpush2.msra.mxu0 0.0
        %812 = vmatprep.subr.mxu0 0.0
        %813 = vmatpush2.msra.mxu0 0.0
        %814 = vmatprep.subr.mxu0 0.0
        %815 = vmatpush2.msra.mxu0 0.0
        %816 = vmatprep.subr.mxu0 0.0
        %817 = vmatpush2.msra.mxu0 0.0
        %818 = vmatprep.subr.mxu0 0.0
        %819 = vmatpush2.msra.mxu0 0.0
        %820 = vmatprep.subr.mxu0 0.0
        %821 = vmatpush2.msra.mxu0 0.0
        %822 = vmatprep.subr.mxu0 0.0
        %823 = vmatpush2.msra.mxu0 0.0
        %824 = vmatprep.subr.mxu0 0.0
        %825 = vmatpush2.msra.mxu0 0.0
        %826 = vmatprep.subr.mxu0 0.0
        %827 = vmatpush2.msra.mxu0 0.0
        %828 = vmatprep.subr.mxu0 0.0
        %829 = vmatpush2.msra.mxu0 0.0
        %830 = vmatprep.subr.mxu0 0.0
        %831 = vmatpush2.msra.mxu0 0.0
        %832 = vmatprep.mubr.f32.mxu0 0.0
        %833 = vmatmul.mubr.f32.gmra.mxu0 %v757
        %v834 = vpop.f32.mrf.mxu0
        %v835 = vadd.f32 0.0, %v834
        %v836 = vpop.f32.mrf.mxu0
        %837 = vmatprep.mubr.f32.mxu0 0.0
        %838 = vmatmul.mubr.f32.gmra.mxu0 %v760
        %v839 = vpop.f32.mrf.mxu0
        %v840 = vadd.f32 0.0, %v839
        %v841 = vpop.f32.mrf.mxu0
        %842 = vmatprep.mubr.f32.mxu0 0.0
        %843 = vmatmul.mubr.f32.gmra.mxu0 %v763
        %v844 = vpop.f32.mrf.mxu0
        %v845 = vadd.f32 0.0, %v844
        %v846 = vpop.f32.mrf.mxu0
        %847 = vmatprep.mubr.f32.mxu0 0.0
        %848 = vmatmul.mubr.f32.gmra.mxu0 %v766
        %v849 = vpop.f32.mrf.mxu0
        %v850 = vadd.f32 0.0, %v849
        %v851 = vpop.f32.mrf.mxu0
        %852 = vdwg.mxu0
        %853 = vst.msk [vmem:[%s365] sm:$0xff] %vm403, %v738
        %854 = vst.msk [vmem:[%s365 + $0x8] sm:$0xff] %vm403, %v743
        %855 = vst.msk [vmem:[%s365 + $0x10] sm:$0xff] %vm403, %v748
        %856 = vst.msk [vmem:[%s365 + $0x18] sm:$0xff] %vm403, %v753
        %857 = vst.msk [vmem:[%s372] sm:$0xff] %vm403, %v835
        %858 = vst.msk [vmem:[%s372 + $0x8] sm:$0xff] %vm403, %v840
        %859 = vst.msk [vmem:[%s372 + $0x10] sm:$0xff] %vm403, %v845
        %860 = vst.msk [vmem:[%s372 + $0x18] sm:$0xff] %vm403, %v850
        %861 = vst.msk [vmem:[%s379] sm:$0xff] %vm403, %v600
        %862 = vst.msk [vmem:[%s379 + $0x8] sm:$0xff] %vm403, %v601
        %863 = vst.msk [vmem:[%s379 + $0x10] sm:$0xff] %vm403, %v602
        %864 = vst.msk [vmem:[%s379 + $0x18] sm:$0xff] %vm403, %v603
        %865 = vst.msk [vmem:[%s386] sm:$0xff] %vm403, %v655
        %866 = vst.msk [vmem:[%s386 + $0x8] sm:$0xff] %vm403, %v656
        %867 = vst.msk [vmem:[%s386 + $0x10] sm:$0xff] %vm403, %v657
        %868 = vst.msk [vmem:[%s386 + $0x18] sm:$0xff] %vm403, %v658
        %s869 = sand.u32 %s146, 1
        %s870 = scalar_lea.sflag [#allocation4], %s869
        %s871 = sand.u32 %s146, 1
        %s872 = smul.addr %s871, 32
        %s873 = scalar_lea.vmem [#allocation7], %s872
        %s874 = sand.u32 %s34, 1
        %s875 = scalar_lea.sflag [#allocation9], %s874
        %s876 = sand.u32 %s172, 1
        %s877 = smul.addr %s876, 32
        %s878 = scalar_lea.vmem [#allocation8], %s877
        %s879 = sand.u32 %s34, 1
        %s880 = scalar_lea.sflag [#allocation9], %s879
        %s881 = sand.u32 %s198, 1
        %s882 = smul.addr %s881, 32
        %s883 = scalar_lea.vmem [#allocation10], %s882
        %s884 = sand.u32 %s224, 1
        %s885 = scalar_lea.sflag [#allocation12], %s884
        %s886 = sand.u32 %s224, 1
        %s887 = smul.addr %s886, 32
        %s888 = scalar_lea.vmem [#allocation11], %s887
        // Predicated region
        $region45: #{tpu_custom_call.1} parent=35 // pred_check
          %p889 = pneg %p156
        $region46: #{tpu_custom_call.1} parent=35 // pred_check_branch
          %891 = sbr.rel (%p889) target = $region48
        $region47: #{tpu_custom_call.1} parent=35 // pred_region
          %s893 = ssub.s32 512, 512
          %894 = vsyncadd %s870, %s893
          %s895 = smul.addr %s34, 4
          %s896 = smul.addr %s895, 128
          %s897 = scalar_lea.hbm %s4, %s896
          %s898 = sshll.u32 %s873, 4
          %s899 = int_to_ptr.vmem [resolvable:$true] %s898
          %904 = dma.vmem_to_hbm [thread:$0]  %s899, 512, %s897, %s870, 128, 128, 8
        $region48: #{tpu_custom_call.1} parent=35 // pred_fallthru
          _
        // Predicated region
        $region49: #{tpu_custom_call.1} parent=35 // pred_check
          %p905 = pneg %p182
        $region50: #{tpu_custom_call.1} parent=35 // pred_check_branch
          %907 = sbr.rel (%p905) target = $region52
        $region51: #{tpu_custom_call.1} parent=35 // pred_region
          %s909 = ssub.s32 512, 512
          %910 = vsyncadd %s875, %s909
          %s911 = smul.addr %s34, 4
          %s912 = smul.addr %s911, 128
          %s913 = scalar_lea.hbm %s5, %s912
          %s914 = sshll.u32 %s878, 4
          %s915 = int_to_ptr.vmem [resolvable:$true] %s914
          %920 = dma.vmem_to_hbm [thread:$0]  %s915, 512, %s913, %s875, 128, 128, 8
        $region52: #{tpu_custom_call.1} parent=35 // pred_fallthru
          _
        // Predicated region
        $region53: #{tpu_custom_call.1} parent=35 // pred_check
          %p921 = pneg %p208
        $region54: #{tpu_custom_call.1} parent=35 // pred_check_branch
          %923 = sbr.rel (%p921) target = $region56
        $region55: #{tpu_custom_call.1} parent=35 // pred_region
          %s925 = ssub.s32 512, 512
          %926 = vsyncadd %s880, %s925
          %s927 = smul.addr %s34, 4
          %s928 = smul.addr %s927, 128
          %s929 = scalar_lea.hbm %s6, %s928
          %s930 = sshll.u32 %s883, 4
          %s931 = int_to_ptr.vmem [resolvable:$true] %s930
          %936 = dma.vmem_to_hbm [thread:$0]  %s931, 512, %s929, %s880, 128, 128, 8
        $region56: #{tpu_custom_call.1} parent=35 // pred_fallthru
          _
        // Predicated region
        $region57: #{tpu_custom_call.1} parent=35 // pred_check
          %p937 = pneg %p234
        $region58: #{tpu_custom_call.1} parent=35 // pred_check_branch
          %939 = sbr.rel (%p937) target = $region60
        $region59: #{tpu_custom_call.1} parent=35 // pred_region
          %s941 = ssub.s32 512, 512
          %942 = vsyncadd %s885, %s941
          %s943 = smul.addr %s34, 4
          %s944 = smul.addr %s943, 128
          %s945 = scalar_lea.hbm %s7, %s944
          %s946 = sshll.u32 %s888, 4
          %s947 = int_to_ptr.vmem [resolvable:$true] %s946
          %952 = dma.vmem_to_hbm [thread:$0]  %s947, 512, %s945, %s885, 128, 128, 8
        $region60: #{tpu_custom_call.1} parent=35 // pred_fallthru
          _
      $region36: #{tpu_custom_call.1} parent=5 // pred_fallthru
        _
      %p953 = scmp.le.s32.totalorder 2, %s29
      // Predicated region
      $region61: #{tpu_custom_call.1} parent=5 // pred_check
        %p954 = pneg %p953
      $region62: #{tpu_custom_call.1} parent=5 // pred_check_branch
        %956 = sbr.rel (%p954) target = $region64
      $region63: #{tpu_custom_call.1} parent=5 // pred_region
        %s957 = ssub.s32 %s29, 2
        // Predicated region
        $region65: #{tpu_custom_call.1} parent=63 // pred_check
          %p958 = pneg %p162
        $region66: #{tpu_custom_call.1} parent=63 // pred_check_branch
          %960 = sbr.rel (%p958) target = $region68
        $region67: #{tpu_custom_call.1} parent=63 // pred_region
          %s961 = sand.u32 %s147, 1
          %s962 = scalar_lea.sflag [#allocation4], %s961
          %s963 = sand.u32 %s147, 1
          %s964 = smul.addr %s963, 32
          %s965 = scalar_lea.vmem [#allocation7], %s964
          %966 = dma.done %s962, 512
        $region68: #{tpu_custom_call.1} parent=63 // pred_fallthru
          _
        // Predicated region
        $region69: #{tpu_custom_call.1} parent=63 // pred_check
          %p967 = pneg %p188
        $region70: #{tpu_custom_call.1} parent=63 // pred_check_branch
          %969 = sbr.rel (%p967) target = $region72
        $region71: #{tpu_custom_call.1} parent=63 // pred_region
          %s970 = sand.u32 %s35, 1
          %s971 = scalar_lea.sflag [#allocation9], %s970
          %s972 = sand.u32 %s173, 1
          %s973 = smul.addr %s972, 32
          %s974 = scalar_lea.vmem [#allocation8], %s973
          %975 = dma.done %s971, 512
        $region72: #{tpu_custom_call.1} parent=63 // pred_fallthru
          _
        // Predicated region
        $region73: #{tpu_custom_call.1} parent=63 // pred_check
          %p976 = pneg %p214
        $region74: #{tpu_custom_call.1} parent=63 // pred_check_branch
          %978 = sbr.rel (%p976) target = $region76
        $region75: #{tpu_custom_call.1} parent=63 // pred_region
          %s979 = sand.u32 %s35, 1
          %s980 = scalar_lea.sflag [#allocation9], %s979
          %s981 = sand.u32 %s199, 1
          %s982 = smul.addr %s981, 32
          %s983 = scalar_lea.vmem [#allocation10], %s982
          %984 = dma.done %s980, 512
        $region76: #{tpu_custom_call.1} parent=63 // pred_fallthru
          _
        // Predicated region
        $region77: #{tpu_custom_call.1} parent=63 // pred_check
          %p985 = pneg %p240
        $region78: #{tpu_custom_call.1} parent=63 // pred_check_branch
          %987 = sbr.rel (%p985) target = $region80
        $region79: #{tpu_custom_call.1} parent=63 // pred_region
          %s988 = sand.u32 %s225, 1
          %s989 = scalar_lea.sflag [#allocation12], %s988
          %s990 = sand.u32 %s225, 1
          %s991 = smul.addr %s990, 32
          %s992 = scalar_lea.vmem [#allocation11], %s991
          %993 = dma.done %s989, 512
        $region80: #{tpu_custom_call.1} parent=63 // pred_fallthru
          _
      $region64: #{tpu_custom_call.1} parent=5 // pred_fallthru
        _
    $region6: #{tpu_custom_call.1} parent=1 // loop_footer
      %s33 = sadd.s32 1, %s29
    $region7: #{tpu_custom_call.1} parent=1 // loop_footer_branch
      %28 = sbr.rel target = $region3
    $region8: #{tpu_custom_call.1} parent=1 // loop_exit
      _
    %994 = vsyncpa [#allocation3], 1
    %s995 = scalar_lea.sflag [#allocation3], 1
    %996 = vsyncpa %s995, 1
    %997 = vsyncpa [#allocation6], 1
    %s998 = scalar_lea.sflag [#allocation6], 1
    %999 = vsyncpa %s998, 1
    %1000 = vsyncpa [#allocation4], 1
    %s1001 = scalar_lea.sflag [#allocation4], 1
    %1002 = vsyncpa %s1001, 1
    %1003 = vsyncpa [#allocation9], 1
    %s1004 = scalar_lea.sflag [#allocation9], 1
    %1005 = vsyncpa %s1004, 1
    %1006 = vsyncpa [#allocation12], 1
    %s1007 = scalar_lea.sflag [#allocation12], 1
    %1008 = vsyncpa %s1007, 1

</llo_original>
